<compile_context>
chip_gen: v7x
topology: tpu7x:2x2x1
jax: 0.10.0
libtpu: 0.0.40
codegen_flags: <defaults>
</compile_context>

<pallas_src>
import functools
from typing import NamedTuple

import jax
import jax.numpy as jnp
from jax import lax
from jax.experimental import pallas as pl
from jax.experimental.pallas import tpu as pltpu


class Cfg(NamedTuple):
    d_in: int = 32
    d_hidden_mult: int = 4
    add_pre_bias: bool = True
    per_neuron_coeff: bool = True
    l1_sqrt: bool = False
    act: str = "relu"
    renorm_to: float = 1.0


def _round_up(x: int, m: int) -> int:
    return (x + m - 1) // m * m


def _vmem_capacity_bytes() -> int:
    try:
        info = pltpu.get_tpu_info()
        cap = getattr(info, "vmem_capacity_bytes", None)
        if cap:
            return int(cap)
    except Exception:
        pass
    return 64 << 20  # conservative fallback (v7x per-TC VMEM)


def _plan_tiles(batch: int, d_in: int, d_hidden: int):
    """Pick the batch tile TB and whether a padded/masked last tile is needed.

    Targets a double-buffered streaming working set of ~1/4 of VMEM capacity
    (capped at 16 MiB): large enough to amortize the ~0.35us/step pipeline
    overhead on v5e/v6e, small enough to fit v7x's 64 MiB VMEM.
    """
    vmem_cap = _vmem_capacity_bytes()
    budget = min(16 << 20, max(vmem_cap // 4, 4 << 20))
    per_row = 2 * 4 * (3 * d_in + d_hidden)  # x,y,x_pred,acts f32, double-buffered
    tb_max = max(8, (budget // per_row) // 8 * 8)

    if batch <= tb_max:
        # single full-batch tile (block == full dim, so non-multiple-of-8 ok)
        return batch, False
    if batch % 8 == 0:
        # prefer a tile that divides the batch -> no pad, no in-kernel mask
        for tb in range(tb_max, 7, -8):
            if batch % tb == 0:
                return tb, False
    tb = tb_max
    return tb, (batch % tb != 0)


# ---------------------------------------------------------------------------
# Kernel (one batch tile per grid step; no cross-tile state)
# ---------------------------------------------------------------------------
def _mlp_kernel(x_ref, y_ref, w_enc_ref, w_dec_ref, b_enc_ref, b_dec_ref,
                coeff_ref,
                xpred_ref, act_ref, l2_ref, l1_ref,
                *, l1_sqrt: bool, act: str, need_mask: bool, n_valid: int,
                tb: int):
    x = x_ref[...].astype(jnp.float32)

    # encode: (TB, d_in) @ (d_in, d_hidden) + b_enc_eff  (b_pre already folded)
    pre = jnp.dot(x.astype(w_enc_ref.dtype), w_enc_ref[...],
                  preferred_element_type=jnp.float32)
    pre = pre + b_enc_ref[...]
    if act == "relu":
        acts = jnp.maximum(pre, 0.0)
    elif act == "gelu":
        acts = jax.nn.gelu(pre, approximate=False)  # matches torch nn.GELU default
    else:
        raise NotImplementedError(act)
    act_ref[...] = acts.astype(act_ref.dtype)

    # decode: (TB, d_hidden) @ (d_hidden, d_in) + b_dec
    x_pred = jnp.dot(acts.astype(w_dec_ref.dtype), w_dec_ref[...],
                     preferred_element_type=jnp.float32)
    x_pred = x_pred + b_dec_ref[...]
    xpred_ref[...] = x_pred.astype(xpred_ref.dtype)

    diff = x_pred - y_ref[...].astype(jnp.float32)
    # relu acts are already non-negative -> skip the redundant max
    pos = acts if act == "relu" else jnp.maximum(acts, 0.0)
    if l1_sqrt:
        pos = jnp.sqrt(pos)

    def write_partials(valid):
        d2 = diff * diff
        p = pos
        if valid is not None:
            d2 = jnp.where(valid, d2, 0.0)
            p = jnp.where(valid, p, 0.0)
        l2_tile = jnp.sum(d2)
        # reduce over batch first (sublane reduce), then one (1,d_hidden) scale
        pos_col = jnp.sum(p, axis=0, keepdims=True)            # (1, d_hidden)
        l1_tile = jnp.sum(pos_col * coeff_ref[...])
        l2_ref[...] = jnp.broadcast_to(l2_tile, l2_ref.shape).astype(l2_ref.dtype)
        l1_ref[...] = jnp.broadcast_to(l1_tile, l1_ref.shape).astype(l1_ref.dtype)

    if need_mask:
        i = pl.program_id(0)
        is_last = i == pl.num_programs(0) - 1

        @pl.when(jnp.logical_not(is_last))
        def _():
            write_partials(None)

        @pl.when(is_last)
        def _():
            row = i * tb + lax.broadcasted_iota(jnp.int32, (tb, 1), 0)
            write_partials(row < n_valid)
    else:
        write_partials(None)


# ---------------------------------------------------------------------------
# Wrapper
# ---------------------------------------------------------------------------
def mlp_forward(params, x, y, l1_coeff, cfg: Cfg, *,
                compute_dtype=jnp.float32):
    B, d_in = x.shape
    d_hidden = cfg.d_in * cfg.d_hidden_mult
    assert d_in == cfg.d_in

    w_enc_f32 = params["W_enc"].astype(jnp.float32)
    w_enc = w_enc_f32.astype(compute_dtype)
    w_dec = params["W_dec"].astype(compute_dtype)
    b_enc = params["b_enc"].astype(jnp.float32).reshape(1, d_hidden)
    b_dec = params["b_dec"].astype(jnp.float32).reshape(1, d_in)
    coeff = params["per_neuron_coeff"].astype(jnp.float32).reshape(1, d_hidden)

    # Fold b_pre into the encoder bias: (x + b_pre) @ W_enc = x @ W_enc + b_pre @ W_enc
    if cfg.add_pre_bias:
        b_pre = params["b_pre"].astype(jnp.float32).reshape(1, d_in)
        b_enc_eff = b_enc + b_pre @ w_enc_f32
    else:
        b_enc_eff = b_enc

    # VMEM guard for the resident weight blocks (x2 for possible double-buffer)
    vmem_cap = _vmem_capacity_bytes()
    weight_bytes = 2 * jnp.dtype(compute_dtype).itemsize * d_in * d_hidden * 2
    if weight_bytes > vmem_cap // 2:
        # TODO(synk): tile the hidden axis (extra grid dim + decode accumulator)
        raise NotImplementedError(
            "W_enc/W_dec do not fit resident in VMEM; hidden-axis tiling not "
            "implemented.")

    # batch tiling (prefer a tile that divides the batch -> no pad/slice copies)
    TB, _ = _plan_tiles(B, d_in, d_hidden)
    B_pad = _round_up(B, TB)
    need_mask = B_pad != B
    if need_mask:
        pad = B_pad - B
        x_p = jnp.pad(x, ((0, pad), (0, 0)))
        y_p = jnp.pad(y, ((0, pad), (0, 0)))
    else:
        x_p, y_p = x, y
    num_tiles = B_pad // TB

    kernel = functools.partial(
        _mlp_kernel,
        l1_sqrt=cfg.l1_sqrt,
        act=cfg.act,
        need_mask=need_mask,
        n_valid=B,
        tb=TB,
    )

    tiled = lambda shape: pl.BlockSpec(shape, lambda i: (i, 0))    # batch-tiled
    resident = lambda shape: pl.BlockSpec(shape, lambda i: (0, 0)) # whole array
    partial_spec = pl.BlockSpec((1, 8, 128), lambda i: (i, 0, 0))  # per-tile scalar

    out_dtype = x.dtype
    out_shapes = (
        jax.ShapeDtypeStruct((B_pad, d_in), out_dtype),          # x_pred
        jax.ShapeDtypeStruct((B_pad, d_hidden), out_dtype),      # activations
        jax.ShapeDtypeStruct((num_tiles, 8, 128), jnp.float32),  # l2 partials
        jax.ShapeDtypeStruct((num_tiles, 8, 128), jnp.float32),  # l1 partials
    )

    # compiler params: batch axis fully parallel (no cross-tile carry any more)
    stream_bytes = 2 * 4 * TB * (3 * d_in + d_hidden)   # double-buffered tiles
    misc_bytes = 4 * 4 * (2 * d_hidden + d_in) + 2 * 2 * 4 * 8 * 128
    vmem_est = stream_bytes + weight_bytes + misc_bytes
    cp_kwargs = dict(dimension_semantics=("parallel",))
    if vmem_est > (12 << 20):
        cp_kwargs["vmem_limit_bytes"] = int(
            min(vmem_cap * 0.9, max(vmem_est * 1.5, 32 << 20)))

    n_trans = B_pad * d_hidden if (cfg.act == "gelu" or cfg.l1_sqrt) else 0
    w_item = jnp.dtype(compute_dtype).itemsize
    bytes_accessed = (
        4 * 2 * B_pad * d_in                  # x, y in
        + w_item * 2 * d_in * d_hidden        # W_enc, W_dec
        + 4 * (2 * d_hidden + d_in)           # b_enc_eff, coeff, b_dec
        + 4 * B_pad * d_in                    # x_pred out
        + 4 * B_pad * d_hidden                # acts out
        + 4 * 2 * num_tiles * 8 * 128         # l2/l1 partial blocks
    )
    cost = pl.CostEstimate(
        flops=4 * B_pad * d_in * d_hidden + 6 * B_pad * (d_in + d_hidden),
        transcendentals=n_trans,
        bytes_accessed=bytes_accessed,
    )

    x_pred, acts, l2_part, l1_part = pl.pallas_call(
        kernel,
        out_shape=out_shapes,
        grid=(num_tiles,),
        in_specs=[
            tiled((TB, d_in)),            # x
            tiled((TB, d_in)),            # y
            resident((d_in, d_hidden)),   # W_enc
            resident((d_hidden, d_in)),   # W_dec
            resident((1, d_hidden)),      # b_enc_eff
            resident((1, d_in)),          # b_dec
            resident((1, d_hidden)),      # per_neuron_coeff
        ],
        out_specs=(
            tiled((TB, d_in)),            # x_pred
            tiled((TB, d_hidden)),        # activations
            partial_spec,                 # l2 per-tile partials
            partial_spec,                 # l1 per-tile partials
        ),
        compiler_params=pltpu.CompilerParams(**cp_kwargs),
        cost_estimate=cost,
    )(x_p, y_p, w_enc, w_dec, b_enc_eff, b_dec, coeff)

    if need_mask:
        x_pred = x_pred[:B]
        acts = acts[:B]

    l2_sum = jnp.sum(l2_part[:, 0, 0])
    l1_sum = jnp.sum(l1_part[:, 0, 0])
    l2_loss = l2_sum / jnp.float32(B)
    l1_loss = jnp.asarray(l1_coeff, jnp.float32) * l1_sum
    loss = l2_loss + l1_loss
    return (loss, x_pred, acts, l2_loss, l1_loss)


# ---------------------------------------------------------------------------
# Deterministic parameter construction (mirrors __init__ shapes / semantics)
# ---------------------------------------------------------------------------
def init_params(key, cfg: Cfg):
    d_in = cfg.d_in
    d_hidden = d_in * cfg.d_hidden_mult
    k_enc, k_dec = jax.random.split(key)

    # kaiming_uniform_ (a=0, fan_in = size(1) for a 2D tensor): bound = sqrt(6/fan_in)
    def kaiming_uniform(k, shape):
        fan_in = shape[1]
        bound = (6.0 / fan_in) ** 0.5
        return jax.random.uniform(k, shape, jnp.float32, -bound, bound)

    W_enc = kaiming_uniform(k_enc, (d_in, d_hidden))
    W_dec = kaiming_uniform(k_dec, (d_hidden, d_in))
    W_dec = W_dec / jnp.linalg.norm(W_dec, axis=-1, keepdims=True)

    if cfg.per_neuron_coeff:
        per_neuron = jnp.linspace(2.0, 0.0, d_hidden, dtype=jnp.float32)
    else:
        per_neuron = jnp.ones((d_hidden,), jnp.float32)

    return {
        "W_enc": W_enc,
        "W_dec": W_dec,
        "b_enc": jnp.zeros((d_hidden,), jnp.float32),
        "b_dec": jnp.zeros((d_in,), jnp.float32),
        "b_pre": jnp.zeros((d_in,), jnp.float32),
        "per_neuron_coeff": per_neuron,
    }


if __name__ == "__main__":
    cfg = Cfg(d_in=32, d_hidden_mult=4, add_pre_bias=True,
              per_neuron_coeff=True, l1_sqrt=False, act="relu")
    key = jax.random.PRNGKey(0)
    kp, kx, ky = jax.random.split(key, 3)

    params = init_params(kp, cfg)
    B = 8
    x = jax.random.normal(kx, (B, cfg.d_in), jnp.float32)
    y = jax.random.normal(ky, (B, cfg.d_in), jnp.float32)
    l1_coeff = 0.01

    loss, x_pred, acts, l2, l1 = mlp_forward(params, x, y, l1_coeff, cfg)
    jax.block_until_ready((loss, x_pred, acts, l2, l1))

    # lightweight pure-JAX reference check (mirrors the torch forward)
    x_cent = x + params["b_pre"]
    acts_ref = jnp.maximum(x_cent @ params["W_enc"] + params["b_enc"], 0.0)
    x_pred_ref = acts_ref @ params["W_dec"] + params["b_dec"]
    l2_ref = jnp.mean(jnp.sum((x_pred_ref - y) ** 2, axis=-1))
    l1_ref = l1_coeff * jnp.sum(jnp.maximum(acts_ref, 0.0).sum(0)
                                * params["per_neuron_coeff"])
    assert jnp.allclose(x_pred, x_pred_ref, atol=1e-4, rtol=1e-4)
    assert jnp.allclose(acts, acts_ref, atol=1e-4, rtol=1e-4)
    assert jnp.allclose(l2, l2_ref, atol=1e-3, rtol=1e-4)
    assert jnp.allclose(l1, l1_ref, atol=1e-3, rtol=1e-4)
    assert jnp.allclose(loss, l2_ref + l1_ref, atol=1e-3, rtol=1e-4)

    print("KERNEL_OK")
</pallas_src>

<mosaic_0001>
module attributes {stable_mosaic.version = 11 : i64} {
  func.func @_mlp_kernel(%arg0: i32, %arg1: memref<8x32xf32, #tpu.memory_space<vmem>>, %arg2: memref<8x32xf32, #tpu.memory_space<vmem>>, %arg3: memref<32x128xf32, #tpu.memory_space<vmem>>, %arg4: memref<128x32xf32, #tpu.memory_space<vmem>>, %arg5: memref<1x128xf32, #tpu.memory_space<vmem>>, %arg6: memref<1x32xf32, #tpu.memory_space<vmem>>, %arg7: memref<1x128xf32, #tpu.memory_space<vmem>>, %arg8: memref<8x32xf32, #tpu.memory_space<vmem>>, %arg9: memref<8x128xf32, #tpu.memory_space<vmem>>, %arg10: memref<1x8x128xf32, #tpu.memory_space<vmem>>, %arg11: memref<1x8x128xf32, #tpu.memory_space<vmem>>) attributes {dimension_semantics = [#tpu.dimension_semantics<parallel>], iteration_bounds = array<i64: 1>, scalar_prefetch = 0 : i64, scratch_operands = 0 : i64, tpu.core_type = #tpu.core_type<tc>, window_params = [{transform_indices = @transform_0, window_bounds = array<i64: 8, 32>}, {transform_indices = @transform_1, window_bounds = array<i64: 8, 32>}, {pipeline_mode = #tpu.pipeline_mode<synchronous>, transform_indices = @transform_2, window_bounds = array<i64: 32, 128>}, {pipeline_mode = #tpu.pipeline_mode<synchronous>, transform_indices = @transform_3, window_bounds = array<i64: 128, 32>}, {pipeline_mode = #tpu.pipeline_mode<synchronous>, transform_indices = @transform_4, window_bounds = array<i64: 1, 128>}, {pipeline_mode = #tpu.pipeline_mode<synchronous>, transform_indices = @transform_5, window_bounds = array<i64: 1, 32>}, {pipeline_mode = #tpu.pipeline_mode<synchronous>, transform_indices = @transform_6, window_bounds = array<i64: 1, 128>}, {transform_indices = @transform_7, window_bounds = array<i64: 8, 32>}, {transform_indices = @transform_8, window_bounds = array<i64: 8, 128>}, {transform_indices = @transform_9, window_bounds = array<i64: 1, 8, 128>}, {transform_indices = @transform_10, window_bounds = array<i64: 1, 8, 128>}]} {
    %c0 = arith.constant 0 : index
    %c0_0 = arith.constant 0 : index
    %0 = vector.load %arg1[%c0, %c0_0] : memref<8x32xf32, #tpu.memory_space<vmem>>, vector<8x32xf32>
    %c0_1 = arith.constant 0 : index
    %c0_2 = arith.constant 0 : index
    %1 = vector.load %arg3[%c0_1, %c0_2] : memref<32x128xf32, #tpu.memory_space<vmem>>, vector<32x128xf32>
    %cst = arith.constant dense<0.000000e+00> : vector<8x128xf32>
    %2 = tpu.matmul %0, %1, %cst {dimension_numbers = #tpu.dot_dimension_numbers<[1], [0], [0], [1], [0, 0, 1, 1], [], []>} : vector<8x32xf32>, vector<32x128xf32>, vector<8x128xf32> -> vector<8x128xf32>
    %c0_3 = arith.constant 0 : index
    %c0_4 = arith.constant 0 : index
    %3 = vector.load %arg5[%c0_3, %c0_4] : memref<1x128xf32, #tpu.memory_space<vmem>>, vector<1x128xf32>
    %4 = vector.broadcast %3 : vector<1x128xf32> to vector<8x128xf32>
    %5 = arith.addf %2, %4 : vector<8x128xf32>
    %cst_5 = arith.constant 0.000000e+00 : f32
    %6 = vector.broadcast %cst_5 : f32 to vector<8x128xf32>
    %7 = arith.maximumf %5, %6 : vector<8x128xf32>
    %c0_6 = arith.constant 0 : index
    %c0_7 = arith.constant 0 : index
    %8 = vector.load %arg9[%c0_6, %c0_7] : memref<8x128xf32, #tpu.memory_space<vmem>>, vector<8x128xf32>
    tpu.vector_store %arg9[%c0_6, %c0_7], %7 {strides = array<i32>} : memref<8x128xf32, #tpu.memory_space<vmem>>, vector<8x128xf32>,
    %c0_8 = arith.constant 0 : index
    %c0_9 = arith.constant 0 : index
    %9 = vector.load %arg4[%c0_8, %c0_9] : memref<128x32xf32, #tpu.memory_space<vmem>>, vector<128x32xf32>
    %cst_10 = arith.constant dense<0.000000e+00> : vector<8x32xf32>
    %10 = tpu.matmul %7, %9, %cst_10 {dimension_numbers = #tpu.dot_dimension_numbers<[1], [0], [0], [1], [0, 0, 1, 1], [], []>} : vector<8x128xf32>, vector<128x32xf32>, vector<8x32xf32> -> vector<8x32xf32>
    %c0_11 = arith.constant 0 : index
    %c0_12 = arith.constant 0 : index
    %11 = vector.load %arg6[%c0_11, %c0_12] : memref<1x32xf32, #tpu.memory_space<vmem>>, vector<1x32xf32>
    %12 = vector.broadcast %11 : vector<1x32xf32> to vector<8x32xf32>
    %13 = arith.addf %10, %12 : vector<8x32xf32>
    %c0_13 = arith.constant 0 : index
    %c0_14 = arith.constant 0 : index
    %14 = vector.load %arg8[%c0_13, %c0_14] : memref<8x32xf32, #tpu.memory_space<vmem>>, vector<8x32xf32>
    tpu.vector_store %arg8[%c0_13, %c0_14], %13 {strides = array<i32>} : memref<8x32xf32, #tpu.memory_space<vmem>>, vector<8x32xf32>,
    %c0_15 = arith.constant 0 : index
    %c0_16 = arith.constant 0 : index
    %15 = vector.load %arg2[%c0_15, %c0_16] : memref<8x32xf32, #tpu.memory_space<vmem>>, vector<8x32xf32>
    %16 = arith.subf %13, %15 : vector<8x32xf32>
    %17 = arith.mulf %16, %16 : vector<8x32xf32>
    %18 = vector.shape_cast %17 : vector<8x32xf32> to vector<1x8x32xf32>
    %cst_17 = arith.constant dense<0.000000e+00> : vector<1xf32>
    %19 = vector.multi_reduction <add>, %18, %cst_17 [1, 2] : vector<1x8x32xf32> to vector<1xf32>
    %20 = vector.shape_cast %19 : vector<1xf32> to vector<1x1x1xf32>
    %21 = vector.extract %20[0, 0, 0] : f32 from vector<1x1x1xf32>
    %cst_18 = arith.constant dense<0.000000e+00> : vector<128xf32>
    %22 = vector.multi_reduction <add>, %7, %cst_18 [0] : vector<8x128xf32> to vector<128xf32>
    %23 = vector.shape_cast %22 : vector<128xf32> to vector<1x128xf32>
    %c0_19 = arith.constant 0 : index
    %c0_20 = arith.constant 0 : index
    %24 = vector.load %arg7[%c0_19, %c0_20] : memref<1x128xf32, #tpu.memory_space<vmem>>, vector<1x128xf32>
    %25 = arith.mulf %23, %24 : vector<1x128xf32>
    %26 = vector.shape_cast %25 : vector<1x128xf32> to vector<1x1x128xf32>
    %cst_21 = arith.constant dense<0.000000e+00> : vector<1xf32>
    %27 = vector.multi_reduction <add>, %26, %cst_21 [1, 2] : vector<1x1x128xf32> to vector<1xf32>
    %28 = vector.shape_cast %27 : vector<1xf32> to vector<1x1x1xf32>
    %29 = vector.extract %28[0, 0, 0] : f32 from vector<1x1x1xf32>
    %30 = vector.broadcast %21 : f32 to vector<1x8x128xf32>
    %c0_22 = arith.constant 0 : index
    %c0_23 = arith.constant 0 : index
    %c0_24 = arith.constant 0 : index
    %31 = vector.load %arg10[%c0_22, %c0_23, %c0_24] : memref<1x8x128xf32, #tpu.memory_space<vmem>>, vector<1x8x128xf32>
    tpu.vector_store %arg10[%c0_22, %c0_23, %c0_24], %30 {strides = array<i32>} : memref<1x8x128xf32, #tpu.memory_space<vmem>>, vector<1x8x128xf32>,
    %32 = vector.broadcast %29 : f32 to vector<1x8x128xf32>
    %c0_25 = arith.constant 0 : index
    %c0_26 = arith.constant 0 : index
    %c0_27 = arith.constant 0 : index
    %33 = vector.load %arg11[%c0_25, %c0_26, %c0_27] : memref<1x8x128xf32, #tpu.memory_space<vmem>>, vector<1x8x128xf32>
    tpu.vector_store %arg11[%c0_25, %c0_26, %c0_27], %32 {strides = array<i32>} : memref<1x8x128xf32, #tpu.memory_space<vmem>>, vector<1x8x128xf32>,
    return
  }
  func.func @transform_0(%arg0: i32) -> (i32, i32) {
    %c0_i32 = arith.constant 0 : i32
    %c0_i32_0 = arith.constant 0 : i32
    return %arg0, %c0_i32 : i32, i32
  }
  func.func @transform_1(%arg0: i32) -> (i32, i32) {
    %c0_i32 = arith.constant 0 : i32
    %c0_i32_0 = arith.constant 0 : i32
    return %arg0, %c0_i32 : i32, i32
  }
  func.func @transform_2(%arg0: i32) -> (i32, i32) {
    %c0_i32 = arith.constant 0 : i32
    %c0_i32_0 = arith.constant 0 : i32
    %c0_i32_1 = arith.constant 0 : i32
    return %c0_i32, %c0_i32_0 : i32, i32
  }
  func.func @transform_3(%arg0: i32) -> (i32, i32) {
    %c0_i32 = arith.constant 0 : i32
    %c0_i32_0 = arith.constant 0 : i32
    %c0_i32_1 = arith.constant 0 : i32
    return %c0_i32, %c0_i32_0 : i32, i32
  }
  func.func @transform_4(%arg0: i32) -> (i32, i32) {
    %c0_i32 = arith.constant 0 : i32
    %c0_i32_0 = arith.constant 0 : i32
    %c0_i32_1 = arith.constant 0 : i32
    return %c0_i32, %c0_i32_0 : i32, i32
  }
  func.func @transform_5(%arg0: i32) -> (i32, i32) {
    %c0_i32 = arith.constant 0 : i32
    %c0_i32_0 = arith.constant 0 : i32
    %c0_i32_1 = arith.constant 0 : i32
    return %c0_i32, %c0_i32_0 : i32, i32
  }
  func.func @transform_6(%arg0: i32) -> (i32, i32) {
    %c0_i32 = arith.constant 0 : i32
    %c0_i32_0 = arith.constant 0 : i32
    %c0_i32_1 = arith.constant 0 : i32
    return %c0_i32, %c0_i32_0 : i32, i32
  }
  func.func @transform_7(%arg0: i32) -> (i32, i32) {
    %c0_i32 = arith.constant 0 : i32
    %c0_i32_0 = arith.constant 0 : i32
    return %arg0, %c0_i32 : i32, i32
  }
  func.func @transform_8(%arg0: i32) -> (i32, i32) {
    %c0_i32 = arith.constant 0 : i32
    %c0_i32_0 = arith.constant 0 : i32
    return %arg0, %c0_i32 : i32, i32
  }
  func.func @transform_9(%arg0: i32) -> (i32, i32, i32) {
    %c0_i32 = arith.constant 0 : i32
    %c0_i32_0 = arith.constant 0 : i32
    %c0_i32_1 = arith.constant 0 : i32
    return %arg0, %c0_i32, %c0_i32_0 : i32, i32, i32
  }
  func.func @transform_10(%arg0: i32) -> (i32, i32, i32) {
    %c0_i32 = arith.constant 0 : i32
    %c0_i32_0 = arith.constant 0 : i32
    %c0_i32_1 = arith.constant 0 : i32
    return %arg0, %c0_i32, %c0_i32_0 : i32, i32, i32
  }
}

</mosaic_0001>

<llo_original>
// kernel: tpu_custom_call.1
$region0: #{tpu_custom_call.1}
  #allocation0 [shape = 'u32[]', space=smem, size = 0x4, offset = 0x4, fixed_abs, tag = 'smem constant byte address 0x4 - core index']
  #allocation1 [shape = 'u32[144,128]{1,0:T(1,128)}', space=vmem, size = 0x12000, scoped, tag = 'internal scratch']
  %s0 = inlined_call_operand.vmem [shape: f32[8,32], index: 0, kind: input, shape index: {}]
  %s1 = inlined_call_operand.vmem [shape: f32[8,32], index: 1, kind: input, shape index: {}]
  %s2 = inlined_call_operand.vmem [shape: f32[32,128], index: 2, kind: input, shape index: {}]
  %s3 = inlined_call_operand.vmem [shape: f32[128,32], index: 3, kind: input, shape index: {}]
  %s4 = inlined_call_operand.vmem [shape: f32[1,128], index: 4, kind: input, shape index: {}]
  %s5 = inlined_call_operand.vmem [shape: f32[1,32], index: 5, kind: input, shape index: {}]
  %s6 = inlined_call_operand.vmem [shape: f32[1,128], index: 6, kind: input, shape index: {}]
  %s7 = inlined_call_operand.hbm [shape: f32[8,32], index: 7, kind: output, shape index: {0}]
  %s8 = inlined_call_operand.hbm [shape: f32[8,128], index: 8, kind: output, shape index: {1}]
  %s9 = inlined_call_operand.hbm [shape: f32[1,8,128], index: 9, kind: output, shape index: {2}]
  %s10 = inlined_call_operand.hbm [shape: f32[1,8,128], index: 10, kind: output, shape index: {3}]
  %11 = xla_tuple %s7, %s8, %s9, %s10
  %s12 = sld [smem:[#allocation0]]
  $region62: #{tpu_custom_call.1} parent=0
    _
  %s14 = ssub.s32 1, %s12
  %s15 = scalar_select 0, %s14, %s12
  $region1: #{tpu_custom_call.1} parent=0
    #allocation2 [shape = 'u8[4096]{0}', space=vmem, size = 0x1000, scoped, tag = 'output window, operand 0, single buffered']
    #allocation3 [shape = 's32[1]{0}', space=sflag, size = 0x4, scoped, tag = 'scoped memory for tpu_custom_call.1']
    #allocation4 [shape = 'u8[4096]{0}', space=vmem, size = 0x1000, scoped, tag = 'output window, operand 1, single buffered']
    #allocation5 [shape = 's32[1]{0}', space=sflag, size = 0x4, scoped, tag = 'scoped memory for tpu_custom_call.1']
    #allocation6 [shape = 'u8[4096]{0}', space=vmem, size = 0x1000, scoped, tag = 'output window, operand 2, single buffered']
    #allocation7 [shape = 'u8[4096]{0}', space=vmem, size = 0x1000, scoped, tag = 'output window, operand 3, single buffered']
    #allocation8 [shape = 's32[1]{0}', space=sflag, size = 0x4, scoped, tag = 'scoped memory for tpu_custom_call.1']
    %16 = vsyncpa [#allocation3], 0
    %17 = vsyncpa [#allocation5], 0
    %18 = vsyncpa [#allocation8], 0
    // Predicated region
    $region2: #{tpu_custom_call.1} parent=1 // pred_check
      _
    $region3: #{tpu_custom_call.1} parent=1 // pred_check_branch
      %20 = sbr.rel (0) target = $region5
    $region4: #{tpu_custom_call.1} parent=1 // pred_region
      _
    $region5: #{tpu_custom_call.1} parent=1 // pred_fallthru
      _
    // Predicated region
    $region6: #{tpu_custom_call.1} parent=1 // pred_check
      _
    $region7: #{tpu_custom_call.1} parent=1 // pred_check_branch
      %22 = sbr.rel (0) target = $region9
    $region8: #{tpu_custom_call.1} parent=1 // pred_region
      _
    $region9: #{tpu_custom_call.1} parent=1 // pred_fallthru
      _
    // Predicated region
    $region10: #{tpu_custom_call.1} parent=1 // pred_check
      _
    $region11: #{tpu_custom_call.1} parent=1 // pred_check_branch
      %24 = sbr.rel (0) target = $region13
    $region12: #{tpu_custom_call.1} parent=1 // pred_region
      _
    $region13: #{tpu_custom_call.1} parent=1 // pred_fallthru
      _
    // Predicated region
    $region14: #{tpu_custom_call.1} parent=1 // pred_check
      _
    $region15: #{tpu_custom_call.1} parent=1 // pred_check_branch
      %26 = sbr.rel (0) target = $region17
    $region16: #{tpu_custom_call.1} parent=1 // pred_region
      _
    $region17: #{tpu_custom_call.1} parent=1 // pred_fallthru
      _
    // Predicated region
    $region18: #{tpu_custom_call.1} parent=1 // pred_check
      _
    $region19: #{tpu_custom_call.1} parent=1 // pred_check_branch
      %28 = sbr.rel (0) target = $region21
    $region20: #{tpu_custom_call.1} parent=1 // pred_region
      _
    $region21: #{tpu_custom_call.1} parent=1 // pred_fallthru
      _
    // Predicated region
    $region22: #{tpu_custom_call.1} parent=1 // pred_check
      _
    $region23: #{tpu_custom_call.1} parent=1 // pred_check_branch
      %30 = sbr.rel (0) target = $region25
    $region24: #{tpu_custom_call.1} parent=1 // pred_region
      _
    $region25: #{tpu_custom_call.1} parent=1 // pred_fallthru
      _
    // Predicated region
    $region26: #{tpu_custom_call.1} parent=1 // pred_check
      _
    $region27: #{tpu_custom_call.1} parent=1 // pred_check_branch
      %32 = sbr.rel (0) target = $region29
    $region28: #{tpu_custom_call.1} parent=1 // pred_region
      _
    $region29: #{tpu_custom_call.1} parent=1 // pred_fallthru
      _
    %v33 = vld [vmem:[%s0] sm:$0xff]
    %v34 = vld [vmem:[%s2] sm:$0xff]
    %v35 = vld [vmem:[%s2 + $0x8] sm:$0xff]
    %v36 = vld [vmem:[%s2 + $0x10] sm:$0xff]
    %v37 = vld [vmem:[%s2 + $0x18] sm:$0xff]
    %v38 = vld [vmem:[%s4] sm:$0x1]
    %v40 = vlaneseq
    %v41 = vshrl.u32 %v40, 7
    %v42 = vsub.s32 0, %v41
    %v43 = vrot.slane %v38, %v42
    %vm45 = vcmask 261120
    %v47 = vsel %vm45, %v33, 0
    %49 = vmatprep.subr.mxu0 0.0
    %50 = vmatpush1.msra.mxu0 %v34
    %51 = vmatprep.subr.mxu0 0.0
    %52 = vmatpush1.msra.mxu0 %v35
    %53 = vmatprep.subr.mxu0 0.0
    %54 = vmatpush1.msra.mxu0 %v36
    %55 = vmatprep.subr.mxu0 0.0
    %56 = vmatpush1.msra.mxu0 %v37
    %57 = vmatprep.subr.mxu0 0.0
    %58 = vmatpush1.msra.mxu0 0.0
    %59 = vmatprep.subr.mxu0 0.0
    %60 = vmatpush1.msra.mxu0 0.0
    %61 = vmatprep.subr.mxu0 0.0
    %62 = vmatpush1.msra.mxu0 0.0
    %63 = vmatprep.subr.mxu0 0.0
    %64 = vmatpush1.msra.mxu0 0.0
    %65 = vmatprep.subr.mxu0 0.0
    %66 = vmatpush1.msra.mxu0 0.0
    %67 = vmatprep.subr.mxu0 0.0
    %68 = vmatpush1.msra.mxu0 0.0
    %69 = vmatprep.subr.mxu0 0.0
    %70 = vmatpush1.msra.mxu0 0.0
    %71 = vmatprep.subr.mxu0 0.0
    %72 = vmatpush1.msra.mxu0 0.0
    %73 = vmatprep.subr.mxu0 0.0
    %74 = vmatpush1.msra.mxu0 0.0
    %75 = vmatprep.subr.mxu0 0.0
    %76 = vmatpush1.msra.mxu0 0.0
    %77 = vmatprep.subr.mxu0 0.0
    %78 = vmatpush1.msra.mxu0 0.0
    %79 = vmatprep.subr.mxu0 0.0
    %80 = vmatpush1.msra.mxu0 0.0
    %81 = vmatprep.subr.mxu0 0.0
    %82 = vmatpush1.msra.mxu0 0.0
    %83 = vmatprep.subr.mxu0 0.0
    %84 = vmatpush1.msra.mxu0 0.0
    %85 = vmatprep.subr.mxu0 0.0
    %86 = vmatpush1.msra.mxu0 0.0
    %87 = vmatprep.subr.mxu0 0.0
    %88 = vmatpush1.msra.mxu0 0.0
    %89 = vmatprep.subr.mxu0 0.0
    %90 = vmatpush1.msra.mxu0 0.0
    %91 = vmatprep.subr.mxu0 0.0
    %92 = vmatpush1.msra.mxu0 0.0
    %93 = vmatprep.subr.mxu0 0.0
    %94 = vmatpush1.msra.mxu0 0.0
    %95 = vmatprep.subr.mxu0 0.0
    %96 = vmatpush1.msra.mxu0 0.0
    %97 = vmatprep.subr.mxu0 0.0
    %98 = vmatpush1.msra.mxu0 0.0
    %99 = vmatprep.subr.mxu0 0.0
    %100 = vmatpush1.msra.mxu0 0.0
    %101 = vmatprep.subr.mxu0 0.0
    %102 = vmatpush1.msra.mxu0 0.0
    %103 = vmatprep.subr.mxu0 0.0
    %104 = vmatpush1.msra.mxu0 0.0
    %105 = vmatprep.subr.mxu0 0.0
    %106 = vmatpush1.msra.mxu0 0.0
    %107 = vmatprep.subr.mxu0 0.0
    %108 = vmatpush1.msra.mxu0 0.0
    %109 = vmatprep.subr.mxu0 0.0
    %110 = vmatpush1.msra.mxu0 0.0
    %111 = vmatprep.subr.mxu0 0.0
    %112 = vmatpush1.msra.mxu0 0.0
    %113 = vmatprep.mubr.f32.mxu0 0.0
    %114 = vmatmul.mubr.f32.gmra.mrb[0].mxu0 %v47
    %v115 = vpop.f32.mrb[0].mxu0
    %v116 = vadd.f32 %v43, %v115
    %v117 = vpop.f32.mrb[0].mxu0
    %118 = vdwg.mxu0
    %v119 = vmax.f32 %v116, 0.0
    %120 = vst [vmem:[#allocation4] sm:$0xff] %v119
    %v121 = vld [vmem:[%s3] sm:$0xff]
    %v122 = vld [vmem:[%s3 + $0x8] sm:$0xff]
    %v123 = vld [vmem:[%s3 + $0x10] sm:$0xff]
    %v124 = vld [vmem:[%s3 + $0x18] sm:$0xff]
    %v125 = vld [vmem:[%s3 + $0x20] sm:$0xff]
    %v126 = vld [vmem:[%s3 + $0x28] sm:$0xff]
    %v127 = vld [vmem:[%s3 + $0x30] sm:$0xff]
    %v128 = vld [vmem:[%s3 + $0x38] sm:$0xff]
    %v129 = vld [vmem:[%s3 + $0x40] sm:$0xff]
    %v130 = vld [vmem:[%s3 + $0x48] sm:$0xff]
    %v131 = vld [vmem:[%s3 + $0x50] sm:$0xff]
    %v132 = vld [vmem:[%s3 + $0x58] sm:$0xff]
    %v133 = vld [vmem:[%s3 + $0x60] sm:$0xff]
    %v134 = vld [vmem:[%s3 + $0x68] sm:$0xff]
    %v135 = vld [vmem:[%s3 + $0x70] sm:$0xff]
    %v136 = vld [vmem:[%s3 + $0x78] sm:$0xff]
    %v137 = vld [vmem:[%s5] sm:$0x1]
    %v139 = vlaneseq
    %v140 = vshrl.u32 %v139, 7
    %v141 = vsub.s32 0, %v140
    %v142 = vrot.slane %v137, %v141
    %144 = vmatprep.subr.mxu0 0.0
    %145 = vmatpush1.msra.mxu0 %v121
    %146 = vmatprep.subr.mxu0 0.0
    %147 = vmatpush1.msra.mxu0 %v122
    %148 = vmatprep.subr.mxu0 0.0
    %149 = vmatpush1.msra.mxu0 %v123
    %150 = vmatprep.subr.mxu0 0.0
    %151 = vmatpush1.msra.mxu0 %v124
    %152 = vmatprep.subr.mxu0 0.0
    %153 = vmatpush1.msra.mxu0 %v125
    %154 = vmatprep.subr.mxu0 0.0
    %155 = vmatpush1.msra.mxu0 %v126
    %156 = vmatprep.subr.mxu0 0.0
    %157 = vmatpush1.msra.mxu0 %v127
    %158 = vmatprep.subr.mxu0 0.0
    %159 = vmatpush1.msra.mxu0 %v128
    %160 = vmatprep.subr.mxu0 0.0
    %161 = vmatpush1.msra.mxu0 %v129
    %162 = vmatprep.subr.mxu0 0.0
    %163 = vmatpush1.msra.mxu0 %v130
    %164 = vmatprep.subr.mxu0 0.0
    %165 = vmatpush1.msra.mxu0 %v131
    %166 = vmatprep.subr.mxu0 0.0
    %167 = vmatpush1.msra.mxu0 %v132
    %168 = vmatprep.subr.mxu0 0.0
    %169 = vmatpush1.msra.mxu0 %v133
    %170 = vmatprep.subr.mxu0 0.0
    %171 = vmatpush1.msra.mxu0 %v134
    %172 = vmatprep.subr.mxu0 0.0
    %173 = vmatpush1.msra.mxu0 %v135
    %174 = vmatprep.subr.mxu0 0.0
    %175 = vmatpush1.msra.mxu0 %v136
    %176 = vmatprep.subr.mxu0 0.0
    %177 = vmatpush1.msra.mxu0 0.0
    %178 = vmatprep.subr.mxu0 0.0
    %179 = vmatpush1.msra.mxu0 0.0
    %180 = vmatprep.subr.mxu0 0.0
    %181 = vmatpush1.msra.mxu0 0.0
    %182 = vmatprep.subr.mxu0 0.0
    %183 = vmatpush1.msra.mxu0 0.0
    %184 = vmatprep.subr.mxu0 0.0
    %185 = vmatpush1.msra.mxu0 0.0
    %186 = vmatprep.subr.mxu0 0.0
    %187 = vmatpush1.msra.mxu0 0.0
    %188 = vmatprep.subr.mxu0 0.0
    %189 = vmatpush1.msra.mxu0 0.0
    %190 = vmatprep.subr.mxu0 0.0
    %191 = vmatpush1.msra.mxu0 0.0
    %192 = vmatprep.subr.mxu0 0.0
    %193 = vmatpush1.msra.mxu0 0.0
    %194 = vmatprep.subr.mxu0 0.0
    %195 = vmatpush1.msra.mxu0 0.0
    %196 = vmatprep.subr.mxu0 0.0
    %197 = vmatpush1.msra.mxu0 0.0
    %198 = vmatprep.subr.mxu0 0.0
    %199 = vmatpush1.msra.mxu0 0.0
    %200 = vmatprep.subr.mxu0 0.0
    %201 = vmatpush1.msra.mxu0 0.0
    %202 = vmatprep.subr.mxu0 0.0
    %203 = vmatpush1.msra.mxu0 0.0
    %204 = vmatprep.subr.mxu0 0.0
    %205 = vmatpush1.msra.mxu0 0.0
    %206 = vmatprep.subr.mxu0 0.0
    %207 = vmatpush1.msra.mxu0 0.0
    %208 = vmatprep.mubr.f32.mxu0 0.0
    %209 = vmatmul.mubr.f32.gmra.mrb[0].mxu0 %v119
    %v210 = vpop.f32.mrb[0].mxu0
    %v211 = vadd.f32 %v142, %v210
    %v212 = vpop.f32.mrb[0].mxu0
    %213 = vdwg.mxu0
    %214 = vst.msk [vmem:[#allocation2] sm:$0xff] %vm45, %v211
    %v215 = vld [vmem:[%s1] sm:$0xff]
    %v216 = vsub.f32 %v211, %v215
    %v217 = vmul.f32 %v216, %v216
    %v218 = vsel %vm45, %v217, 0.0
    %219 = vadd.xlane.f32.xlu0 %v218
    %v220 = vpop.xlane.xlu0 %219
    %v221 = vrot.slane %v220, 4
    %v222 = vadd.f32 %v220, %v221
    %v223 = vrot.slane %v222, 2
    %v224 = vadd.f32 %v222, %v223
    %v225 = vrot.slane %v224, 1
    %v226 = vadd.f32 %v224, %v225
    %s227 = vtos %v226
    %v228 = vrot.slane %v119, 4
    %v229 = vadd.f32 %v119, %v228
    %v230 = vrot.slane %v229, 2
    %v231 = vadd.f32 %v229, %v230
    %v232 = vrot.slane %v231, 1
    %v233 = vadd.f32 %v231, %v232
    %v234 = vld [vmem:[%s6] sm:$0x1]
    %v235 = vmul.f32 %v233, %v234
    %vm236 = vcmask 1040384
    %v237 = vsel %vm236, %v235, 0.0
    %238 = vadd.xlane.f32.xlu0 %v237
    %v239 = vpop.xlane.xlu0 %238
    %v240 = vrot.slane %v239, 4
    %v241 = vadd.f32 %v239, %v240
    %v242 = vrot.slane %v241, 2
    %v243 = vadd.f32 %v241, %v242
    %v244 = vrot.slane %v243, 1
    %v245 = vadd.f32 %v243, %v244
    %s246 = vtos %v245
    %v247 = vstv %s227
    %248 = vst [vmem:[#allocation6] sm:$0xff] %v247
    %v249 = vstv %s246
    %250 = vst [vmem:[#allocation7] sm:$0xff] %v249
    // Predicated region
    $region30: #{tpu_custom_call.1} parent=1 // pred_check
      _
    $region31: #{tpu_custom_call.1} parent=1 // pred_check_branch
      %252 = sbr.rel (0) target = $region33
    $region32: #{tpu_custom_call.1} parent=1 // pred_region
      %s254 = ssub.s32 128, 128
      %255 = vsyncadd [#allocation3], %s254
      %s257 = sshll.u32 [#allocation2], 4
      %s258 = int_to_ptr.vmem [resolvable:$true] %s257
      %260 = dma.vmem_to_hbm [thread:$0]  %s258, 128, %s7, [#allocation3]
    $region33: #{tpu_custom_call.1} parent=1 // pred_fallthru
      _
    // Predicated region
    $region34: #{tpu_custom_call.1} parent=1 // pred_check
      _
    $region35: #{tpu_custom_call.1} parent=1 // pred_check_branch
      %262 = sbr.rel (0) target = $region37
    $region36: #{tpu_custom_call.1} parent=1 // pred_region
      %s264 = ssub.s32 128, 128
      %265 = vsyncadd [#allocation5], %s264
      %s267 = sshll.u32 [#allocation4], 4
      %s268 = int_to_ptr.vmem [resolvable:$true] %s267
      %270 = dma.vmem_to_hbm [thread:$0]  %s268, 128, %s8, [#allocation5]
    $region37: #{tpu_custom_call.1} parent=1 // pred_fallthru
      _
    // Predicated region
    $region38: #{tpu_custom_call.1} parent=1 // pred_check
      _
    $region39: #{tpu_custom_call.1} parent=1 // pred_check_branch
      %272 = sbr.rel (0) target = $region41
    $region40: #{tpu_custom_call.1} parent=1 // pred_region
      %s274 = ssub.s32 128, 128
      %275 = vsyncadd [#allocation5], %s274
      %s277 = sshll.u32 [#allocation6], 4
      %s278 = int_to_ptr.vmem [resolvable:$true] %s277
      %280 = dma.vmem_to_hbm [thread:$0]  %s278, 128, %s9, [#allocation5]
    $region41: #{tpu_custom_call.1} parent=1 // pred_fallthru
      _
    // Predicated region
    $region42: #{tpu_custom_call.1} parent=1 // pred_check
      _
    $region43: #{tpu_custom_call.1} parent=1 // pred_check_branch
      %282 = sbr.rel (0) target = $region45
    $region44: #{tpu_custom_call.1} parent=1 // pred_region
      %s284 = ssub.s32 128, 128
      %285 = vsyncadd [#allocation8], %s284
      %s287 = sshll.u32 [#allocation7], 4
      %s288 = int_to_ptr.vmem [resolvable:$true] %s287
      %290 = dma.vmem_to_hbm [thread:$0]  %s288, 128, %s10, [#allocation8]
    $region45: #{tpu_custom_call.1} parent=1 // pred_fallthru
      _
    // Predicated region
    $region46: #{tpu_custom_call.1} parent=1 // pred_check
      _
    $region47: #{tpu_custom_call.1} parent=1 // pred_check_branch
      %292 = sbr.rel (0) target = $region49
    $region48: #{tpu_custom_call.1} parent=1 // pred_region
      %293 = dma.done [#allocation3], 128
    $region49: #{tpu_custom_call.1} parent=1 // pred_fallthru
      _
    // Predicated region
    $region50: #{tpu_custom_call.1} parent=1 // pred_check
      _
    $region51: #{tpu_custom_call.1} parent=1 // pred_check_branch
      %295 = sbr.rel (0) target = $region53
    $region52: #{tpu_custom_call.1} parent=1 // pred_region
      %296 = dma.done [#allocation5], 128
    $region53: #{tpu_custom_call.1} parent=1 // pred_fallthru
      _
    // Predicated region
    $region54: #{tpu_custom_call.1} parent=1 // pred_check
      _
    $region55: #{tpu_custom_call.1} parent=1 // pred_check_branch
      %298 = sbr.rel (0) target = $region57
    $region56: #{tpu_custom_call.1} parent=1 // pred_region
      %299 = dma.done [#allocation5], 128
    $region57: #{tpu_custom_call.1} parent=1 // pred_fallthru
      _
    // Predicated region
    $region58: #{tpu_custom_call.1} parent=1 // pred_check
      _
    $region59: #{tpu_custom_call.1} parent=1 // pred_check_branch
      %301 = sbr.rel (0) target = $region61
    $region60: #{tpu_custom_call.1} parent=1 // pred_region
      %302 = dma.done [#allocation8], 128
    $region61: #{tpu_custom_call.1} parent=1 // pred_fallthru
      _
    %303 = vsyncpa [#allocation3], 1
    %304 = vsyncpa [#allocation5], 1
    %305 = vsyncpa [#allocation8], 1

</llo_original>
